<compile_context>
chip_gen: v7x
topology: tpu7x:2x2x1
jax: 0.10.0
libtpu: 0.0.40
codegen_flags: <defaults>
</compile_context>

<pallas_src>
import math

import jax
import jax.numpy as jnp
from jax.experimental import pallas as pl
from jax.experimental.pallas import tpu as pltpu

MASK_TOKEN_ID = -10.0

# Target bytes for one output tile (one pipeline buffer). >= ~1 MiB reaches ~85% of the
# HBM roofline on measured mem-bound Pallas kernels; 4 MiB double-buffered (+x tiles,
# +slack) stays comfortably inside every generation's scoped-VMEM budget.
DEFAULT_TARGET_TILE_BYTES = 4 * 1024 * 1024


def _round_up(a, m):
    return ((a + m - 1) // m) * m


def _make_kernel(dim, k):
    """Kernel for a (tile_rows, k) x block -> (tile_rows, k*dim) output block."""
    half = dim // 2
    # inv_freq[j] = 100 ** (-2j/dim) = exp(j * (-2*ln(100)/dim))   (analytic in j)
    neg_log_scale = -2.0 * math.log(100.0) / float(dim)

    def kernel(x_ref, out_ref):
        # x_ref:   (tile_rows, k)      float32  token/expression values (k tokens/row)
        # out_ref: (tile_rows, k*dim)  out dtype, row layout [t0 sin|t0 cos|t1 sin|...]
        j = jax.lax.broadcasted_iota(jnp.int32, (1, half), 1).astype(jnp.float32)
        inv = jnp.exp(j * neg_log_scale)                     # (1, half), EUP (has slack)

        for c in range(k):                                   # static unroll, k <= 128
            xc = x_ref[:, c:c + 1]                           # (tile_rows, 1)
            keep = xc != MASK_TOKEN_ID                       # (tile_rows, 1) bool
            phase = xc * inv                                 # (tile_rows, half)
            # jnp.where (not multiply-by-keep): exact zeros even for non-finite x.
            s = jnp.where(keep, jnp.sin(phase), 0.0).astype(out_ref.dtype)
            co = jnp.where(keep, jnp.cos(phase), 0.0).astype(out_ref.dtype)
            base = c * dim                                   # static lane offset
            out_ref[:, base:base + half] = s
            out_ref[:, base + half:base + dim] = co

    return kernel


def positional_expr_embedding(x, dim, *, out_dtype=jnp.float32,
                              target_tile_bytes=DEFAULT_TARGET_TILE_BYTES):
    """x: (B, L) float -> (B, L, dim) out_dtype (float32 by default, matching torch)."""
    assert dim % 2 == 0, "dim must be even"
    B, L = x.shape
    N = B * L

    out_itemsize = jnp.dtype(out_dtype).itemsize
    sub = max(8, 32 // out_itemsize)          # sublane granularity for the out dtype

    # Lane packing: k tokens per packed output row so the row width (k*dim) is a
    # multiple of 128 lanes.  k == 1 whenever dim % 128 == 0.
    k = 128 // math.gcd(dim, 128)
    row_width = k * dim
    row_bytes = row_width * out_itemsize

    n_rows = pl.cdiv(N, k)

    # Byte-budget-aware tile: ~target_tile_bytes per output buffer; the +512 accounts
    # for the x tile lane-padding to 128 lanes (only matters at very small dim).
    target_tile_bytes = min(int(target_tile_bytes), 8 * 1024 * 1024)
    tile_rows = max(target_tile_bytes // (row_bytes + 512), sub)
    tile_rows = _round_up(tile_rows, sub)
    # Ensure >= 2 grid steps when there's enough work (v7x: keep both TCs writing).
    if n_rows >= 2 * sub:
        tile_rows = min(tile_rows, _round_up(pl.cdiv(n_rows, 2), sub))
    tile_rows = min(tile_rows, _round_up(n_rows, sub))
    n_rows_pad = _round_up(n_rows, tile_rows)

    # Flatten tokens into the packed (n_rows_pad, k) layout (row-major == token order).
    x_flat = x.reshape(-1).astype(jnp.float32)
    pad_tokens = n_rows_pad * k - N
    if pad_tokens:
        x_flat = jnp.pad(x_flat, (0, pad_tokens))
    x2d = x_flat.reshape(n_rows_pad, k)

    grid = (n_rows_pad // tile_rows,)

    # Explicit VMEM budget: double-buffered output tile + double-buffered (lane-padded)
    # x tile + slack.  Keeps pipeline depth 2 on v5e (16 MiB default scoped VMEM) and
    # stays within v7x's 64 MiB-per-TC physical VMEM.
    out_tile_bytes = tile_rows * row_bytes
    x_tile_bytes = tile_rows * 128 * 4
    vmem_limit = 2 * out_tile_bytes + 2 * x_tile_bytes + (2 << 20)
    vmem_limit = int(min(max(vmem_limit, 16 << 20), 48 << 20))

    out = pl.pallas_call(
        _make_kernel(dim, k),
        out_shape=jax.ShapeDtypeStruct((n_rows_pad, row_width), out_dtype),
        grid=grid,
        in_specs=[pl.BlockSpec((tile_rows, k), lambda i: (i, 0))],
        out_specs=pl.BlockSpec((tile_rows, row_width), lambda i: (i, 0)),
        compiler_params=pltpu.CompilerParams(
            dimension_semantics=("parallel",),   # shard grid steps across TCs on v7x
            vmem_limit_bytes=vmem_limit,
        ),
    )(x2d)

    # (n_rows_pad, k*dim) row-major == (n_rows_pad*k, dim) row-major; slice off padding.
    return out.reshape(n_rows_pad * k, dim)[:N].reshape(B, L, dim)


def _reference(x, dim):
    """Pure-JAX reference matching the PyTorch module."""
    inv_freq = 1.0 / (100.0 ** (jnp.arange(0, dim, 2, dtype=jnp.float32) / dim))
    phase = jnp.einsum("bi,j->bij", x, inv_freq)
    emb = jnp.concatenate([jnp.sin(phase), jnp.cos(phase)], axis=-1)
    mask = (x == MASK_TOKEN_ID)[:, :, None]
    return jnp.where(mask, 0.0, emb)


if __name__ == "__main__":
    key = jax.random.PRNGKey(0)
    B, L = 2, 8
    x = jax.random.normal(key, (B, L), dtype=jnp.float32) * 3.0
    # Inject mask tokens to exercise the zeroing path.
    x = x.at[0, 2].set(MASK_TOKEN_ID)
    x = x.at[1, 5].set(MASK_TOKEN_ID)

    # Small dim: exercises the k=4 lane-packing path (dim=32 -> 128-lane output rows).
    dim = 32
    out = jax.block_until_ready(positional_expr_embedding(x, dim))
    ref = _reference(x, dim)
    assert out.shape == (B, L, dim)
    assert jnp.allclose(out, ref, atol=1e-5, rtol=1e-5)

    # dim % 256 == 0: k=1, lane-dense half-writes, multi-step "parallel" grid.
    dim = 256
    out = jax.block_until_ready(positional_expr_embedding(x, dim))
    ref = _reference(x, dim)
    assert out.shape == (B, L, dim)
    assert jnp.allclose(out, ref, atol=1e-5, rtol=1e-5)

    # bf16 output path: halves HBM writeback bytes; math stays in f32, cast at store.
    out_bf16 = jax.block_until_ready(
        positional_expr_embedding(x, dim, out_dtype=jnp.bfloat16))
    assert out_bf16.dtype == jnp.bfloat16
    assert jnp.allclose(out_bf16.astype(jnp.float32), ref, atol=1.5e-2, rtol=0.0)

    print("KERNEL_OK")
</pallas_src>

<mosaic_0001>
module attributes {stable_mosaic.version = 11 : i64} {
  func.func @kernel(%arg0: i32, %arg1: memref<8x4xf32, #tpu.memory_space<vmem>>, %arg2: memref<8x128xf32, #tpu.memory_space<vmem>>) attributes {dimension_semantics = [#tpu.dimension_semantics<parallel>], iteration_bounds = array<i64: 1>, scalar_prefetch = 0 : i64, scratch_operands = 0 : i64, tpu.core_type = #tpu.core_type<tc>, window_params = [{transform_indices = @transform_0, window_bounds = array<i64: 8, 4>}, {transform_indices = @transform_1, window_bounds = array<i64: 8, 128>}]} {
    %0 = tpu.iota {dimensions = array<i32: 1>} : vector<1x16xi32>
    %1 = arith.sitofp %0 : vector<1x16xi32> to vector<1x16xf32>
    %cst = arith.constant -0.287823141 : f32
    %2 = vector.broadcast %cst : f32 to vector<1x16xf32>
    %3 = arith.mulf %1, %2 : vector<1x16xf32>
    %4 = math.exp %3 : vector<1x16xf32>
    %c0 = arith.constant 0 : index
    %c0_0 = arith.constant 0 : index
    %5 = vector.load %arg1[%c0, %c0_0] : memref<8x4xf32, #tpu.memory_space<vmem>>, vector<8x1xf32>
    %cst_1 = arith.constant -1.000000e+01 : f32
    %6 = vector.broadcast %cst_1 : f32 to vector<8x1xf32>
    %7 = arith.cmpf one, %5, %6 : vector<8x1xf32>
    %8 = vector.broadcast %5 : vector<8x1xf32> to vector<8x16xf32>
    %9 = vector.broadcast %4 : vector<1x16xf32> to vector<8x16xf32>
    %10 = arith.mulf %8, %9 : vector<8x16xf32>
    %11 = math.sin %10 : vector<8x16xf32>
    %cst_2 = arith.constant 0.000000e+00 : f32
    %12 = vector.shape_cast %7 : vector<8x1xi1> to vector<8x1xi1>
    %13 = vector.broadcast %12 : vector<8x1xi1> to vector<8x16xi1>
    %14 = vector.broadcast %cst_2 : f32 to vector<8x16xf32>
    %15 = arith.select %13, %11, %14 : vector<8x16xi1>, vector<8x16xf32>
    %16 = math.cos %10 : vector<8x16xf32>
    %cst_3 = arith.constant 0.000000e+00 : f32
    %17 = vector.shape_cast %7 : vector<8x1xi1> to vector<8x1xi1>
    %18 = vector.broadcast %17 : vector<8x1xi1> to vector<8x16xi1>
    %19 = vector.broadcast %cst_3 : f32 to vector<8x16xf32>
    %20 = arith.select %18, %16, %19 : vector<8x16xi1>, vector<8x16xf32>
    %c0_4 = arith.constant 0 : index
    %c0_5 = arith.constant 0 : index
    %21 = vector.load %arg2[%c0_4, %c0_5] : memref<8x128xf32, #tpu.memory_space<vmem>>, vector<8x16xf32>
    tpu.vector_store %arg2[%c0_4, %c0_5], %15 {strides = array<i32>} : memref<8x128xf32, #tpu.memory_space<vmem>>, vector<8x16xf32>,
    %c0_6 = arith.constant 0 : index
    %c16 = arith.constant 16 : index
    %22 = vector.load %arg2[%c0_6, %c16] : memref<8x128xf32, #tpu.memory_space<vmem>>, vector<8x16xf32>
    tpu.vector_store %arg2[%c0_6, %c16], %20 {strides = array<i32>} : memref<8x128xf32, #tpu.memory_space<vmem>>, vector<8x16xf32>,
    %c0_7 = arith.constant 0 : index
    %c1 = arith.constant 1 : index
    %23 = vector.load %arg1[%c0_7, %c1] : memref<8x4xf32, #tpu.memory_space<vmem>>, vector<8x1xf32>
    %cst_8 = arith.constant -1.000000e+01 : f32
    %24 = vector.broadcast %cst_8 : f32 to vector<8x1xf32>
    %25 = arith.cmpf one, %23, %24 : vector<8x1xf32>
    %26 = vector.broadcast %23 : vector<8x1xf32> to vector<8x16xf32>
    %27 = vector.broadcast %4 : vector<1x16xf32> to vector<8x16xf32>
    %28 = arith.mulf %26, %27 : vector<8x16xf32>
    %29 = math.sin %28 : vector<8x16xf32>
    %cst_9 = arith.constant 0.000000e+00 : f32
    %30 = vector.shape_cast %25 : vector<8x1xi1> to vector<8x1xi1>
    %31 = vector.broadcast %30 : vector<8x1xi1> to vector<8x16xi1>
    %32 = vector.broadcast %cst_9 : f32 to vector<8x16xf32>
    %33 = arith.select %31, %29, %32 : vector<8x16xi1>, vector<8x16xf32>
    %34 = math.cos %28 : vector<8x16xf32>
    %cst_10 = arith.constant 0.000000e+00 : f32
    %35 = vector.shape_cast %25 : vector<8x1xi1> to vector<8x1xi1>
    %36 = vector.broadcast %35 : vector<8x1xi1> to vector<8x16xi1>
    %37 = vector.broadcast %cst_10 : f32 to vector<8x16xf32>
    %38 = arith.select %36, %34, %37 : vector<8x16xi1>, vector<8x16xf32>
    %c0_11 = arith.constant 0 : index
    %c32 = arith.constant 32 : index
    %39 = vector.load %arg2[%c0_11, %c32] : memref<8x128xf32, #tpu.memory_space<vmem>>, vector<8x16xf32>
    tpu.vector_store %arg2[%c0_11, %c32], %33 {strides = array<i32>} : memref<8x128xf32, #tpu.memory_space<vmem>>, vector<8x16xf32>,
    %c0_12 = arith.constant 0 : index
    %c48 = arith.constant 48 : index
    %40 = vector.load %arg2[%c0_12, %c48] : memref<8x128xf32, #tpu.memory_space<vmem>>, vector<8x16xf32>
    tpu.vector_store %arg2[%c0_12, %c48], %38 {strides = array<i32>} : memref<8x128xf32, #tpu.memory_space<vmem>>, vector<8x16xf32>,
    %c0_13 = arith.constant 0 : index
    %c2 = arith.constant 2 : index
    %41 = vector.load %arg1[%c0_13, %c2] : memref<8x4xf32, #tpu.memory_space<vmem>>, vector<8x1xf32>
    %cst_14 = arith.constant -1.000000e+01 : f32
    %42 = vector.broadcast %cst_14 : f32 to vector<8x1xf32>
    %43 = arith.cmpf one, %41, %42 : vector<8x1xf32>
    %44 = vector.broadcast %41 : vector<8x1xf32> to vector<8x16xf32>
    %45 = vector.broadcast %4 : vector<1x16xf32> to vector<8x16xf32>
    %46 = arith.mulf %44, %45 : vector<8x16xf32>
    %47 = math.sin %46 : vector<8x16xf32>
    %cst_15 = arith.constant 0.000000e+00 : f32
    %48 = vector.shape_cast %43 : vector<8x1xi1> to vector<8x1xi1>
    %49 = vector.broadcast %48 : vector<8x1xi1> to vector<8x16xi1>
    %50 = vector.broadcast %cst_15 : f32 to vector<8x16xf32>
    %51 = arith.select %49, %47, %50 : vector<8x16xi1>, vector<8x16xf32>
    %52 = math.cos %46 : vector<8x16xf32>
    %cst_16 = arith.constant 0.000000e+00 : f32
    %53 = vector.shape_cast %43 : vector<8x1xi1> to vector<8x1xi1>
    %54 = vector.broadcast %53 : vector<8x1xi1> to vector<8x16xi1>
    %55 = vector.broadcast %cst_16 : f32 to vector<8x16xf32>
    %56 = arith.select %54, %52, %55 : vector<8x16xi1>, vector<8x16xf32>
    %c0_17 = arith.constant 0 : index
    %c64 = arith.constant 64 : index
    %57 = vector.load %arg2[%c0_17, %c64] : memref<8x128xf32, #tpu.memory_space<vmem>>, vector<8x16xf32>
    tpu.vector_store %arg2[%c0_17, %c64], %51 {strides = array<i32>} : memref<8x128xf32, #tpu.memory_space<vmem>>, vector<8x16xf32>,
    %c0_18 = arith.constant 0 : index
    %c80 = arith.constant 80 : index
    %58 = vector.load %arg2[%c0_18, %c80] : memref<8x128xf32, #tpu.memory_space<vmem>>, vector<8x16xf32>
    tpu.vector_store %arg2[%c0_18, %c80], %56 {strides = array<i32>} : memref<8x128xf32, #tpu.memory_space<vmem>>, vector<8x16xf32>,
    %c0_19 = arith.constant 0 : index
    %c3 = arith.constant 3 : index
    %59 = vector.load %arg1[%c0_19, %c3] : memref<8x4xf32, #tpu.memory_space<vmem>>, vector<8x1xf32>
    %cst_20 = arith.constant -1.000000e+01 : f32
    %60 = vector.broadcast %cst_20 : f32 to vector<8x1xf32>
    %61 = arith.cmpf one, %59, %60 : vector<8x1xf32>
    %62 = vector.broadcast %59 : vector<8x1xf32> to vector<8x16xf32>
    %63 = vector.broadcast %4 : vector<1x16xf32> to vector<8x16xf32>
    %64 = arith.mulf %62, %63 : vector<8x16xf32>
    %65 = math.sin %64 : vector<8x16xf32>
    %cst_21 = arith.constant 0.000000e+00 : f32
    %66 = vector.shape_cast %61 : vector<8x1xi1> to vector<8x1xi1>
    %67 = vector.broadcast %66 : vector<8x1xi1> to vector<8x16xi1>
    %68 = vector.broadcast %cst_21 : f32 to vector<8x16xf32>
    %69 = arith.select %67, %65, %68 : vector<8x16xi1>, vector<8x16xf32>
    %70 = math.cos %64 : vector<8x16xf32>
    %cst_22 = arith.constant 0.000000e+00 : f32
    %71 = vector.shape_cast %61 : vector<8x1xi1> to vector<8x1xi1>
    %72 = vector.broadcast %71 : vector<8x1xi1> to vector<8x16xi1>
    %73 = vector.broadcast %cst_22 : f32 to vector<8x16xf32>
    %74 = arith.select %72, %70, %73 : vector<8x16xi1>, vector<8x16xf32>
    %c0_23 = arith.constant 0 : index
    %c96 = arith.constant 96 : index
    %75 = vector.load %arg2[%c0_23, %c96] : memref<8x128xf32, #tpu.memory_space<vmem>>, vector<8x16xf32>
    tpu.vector_store %arg2[%c0_23, %c96], %69 {strides = array<i32>} : memref<8x128xf32, #tpu.memory_space<vmem>>, vector<8x16xf32>,
    %c0_24 = arith.constant 0 : index
    %c112 = arith.constant 112 : index
    %76 = vector.load %arg2[%c0_24, %c112] : memref<8x128xf32, #tpu.memory_space<vmem>>, vector<8x16xf32>
    tpu.vector_store %arg2[%c0_24, %c112], %74 {strides = array<i32>} : memref<8x128xf32, #tpu.memory_space<vmem>>, vector<8x16xf32>,
    return
  }
  func.func @transform_0(%arg0: i32) -> (i32, i32) {
    %c0_i32 = arith.constant 0 : i32
    %c0_i32_0 = arith.constant 0 : i32
    return %arg0, %c0_i32 : i32, i32
  }
  func.func @transform_1(%arg0: i32) -> (i32, i32) {
    %c0_i32 = arith.constant 0 : i32
    %c0_i32_0 = arith.constant 0 : i32
    return %arg0, %c0_i32 : i32, i32
  }
}

</mosaic_0001>

<llo_original>
// kernel: tpu_custom_call.1
$region0: #{tpu_custom_call.1}
  #allocation0 [shape = 'u32[]', space=smem, size = 0x4, offset = 0x4, fixed_abs, tag = 'smem constant byte address 0x4 - core index']
  #allocation1 [shape = 'u32[144,128]{1,0:T(1,128)}', space=vmem, size = 0x12000, scoped, tag = 'internal scratch']
  %s0 = inlined_call_operand.vmem [shape: f32[8,4], index: 0, kind: input, shape index: {}]
  %s1 = inlined_call_operand.hbm [shape: f32[8,128], index: 1, kind: output, shape index: {}]
  %s2 = sld [smem:[#allocation0]]
  $region14: #{tpu_custom_call.1} parent=0
    _
  %s4 = ssub.s32 1, %s2
  %s5 = scalar_select 0, %s4, %s2
  $region1: #{tpu_custom_call.1} parent=0
    #allocation2 [shape = 'u8[4096]{0}', space=vmem, size = 0x1000, scoped, tag = 'output window, operand 0, single buffered']
    #allocation3 [shape = 's32[1]{0}', space=sflag, size = 0x4, scoped, tag = 'scoped memory for tpu_custom_call.1']
    %6 = vsyncpa [#allocation3], 0
    // Predicated region
    $region2: #{tpu_custom_call.1} parent=1 // pred_check
      _
    $region3: #{tpu_custom_call.1} parent=1 // pred_check_branch
      %8 = sbr.rel (0) target = $region5
    $region4: #{tpu_custom_call.1} parent=1 // pred_region
      _
    $region5: #{tpu_custom_call.1} parent=1 // pred_fallthru
      _
    %v9 = vlaneseq
    %v10 = vand.u32 %v9, 127
    %v11 = vcvt.s32.f32 %v10
    %v12 = vmul.f32 %v11, -0.28782314
    %v13 = vmul.f32 %v12, 1.442695
    %v14 = vpow.pop %v13
    %v15 = vld [vmem:[%s0] sm:$0xff]
    %vm16 = vcmp.ne.f32.partialorder %v15, -10.0
    %18 = vset.pattern.permute.xlu0 0
    %19 = vperm.xlu0 %18, %v15
    %v20 = vpop.permute.xlu0 %19
    %v22 = vmul.f32 %v20, %v14
    %v23 = vand.u32 2147483647, %v22
    %vm24 = vcmp.le.f32.partialorder %v23, 0.7853982
    %vm25 = vcmp.lt.s32.totalorder %v22, 0
    %v26 = vand.u32 %v22, 2139095040
    %v27 = vshrl.u32 %v26, 23
    %v28 = vsub.s32 %v27, 127
    %v29 = vand.u32 2147483647, %v22
    %v30 = vand.u32 %v29, 8388607
    %v31 = vor.u32 %v30, 8388608
    %v32 = vsub.s32 0, %v31
    %v33 = vadd.s32 %v28, 1
    %vm34 = vcmp.gt.s32.totalorder %v33, 0
    %v35 = vsel %vm34, %v33, 0
    %v36 = vshrl.u32 %v35, 5
    %v37 = vand.u32 %v35, 31
    %v38 = vsub.s32 32, %v37
    %v39 = vshrl.u32 683565275, %v38
    %v40 = vshll.u32 683565275, %v37
    %v41 = vshrl.u32 2475754826, %v38
    %v42 = vor.u32 %v40, %v41
    %v43 = vshll.u32 2475754826, %v37
    %v44 = vshrl.u32 2131351028, %v38
    %v45 = vor.u32 %v43, %v44
    %v46 = vshll.u32 2131351028, %v37
    %v47 = vshrl.u32 2102212464, %v38
    %v48 = vor.u32 %v46, %v47
    %v49 = vshll.u32 2102212464, %v37
    %v50 = vshrl.u32 920167782, %v38
    %v51 = vor.u32 %v49, %v50
    %v52 = vshll.u32 920167782, %v37
    %v53 = vshrl.u32 1326507024, %v38
    %v54 = vor.u32 %v52, %v53
    %vm55 = vcmp.lt.s32.totalorder %v36, 1
    %vm56 = vcmp.lt.s32.totalorder %v36, 2
    %vm57 = vcmp.lt.s32.totalorder %v36, 3
    %vm58 = vcmp.lt.s32.totalorder %v36, 4
    %v59 = vsel %vm55, %v39, %v42
    %v60 = vsel %vm58, %v48, 2102212464
    %v61 = vsel %vm57, %v45, %v60
    %v62 = vsel %vm56, %v59, %v61
    %v63 = vsel %vm55, %v42, %v45
    %v64 = vsel %vm58, %v51, 920167782
    %v65 = vsel %vm57, %v48, %v64
    %v66 = vsel %vm56, %v63, %v65
    %v67 = vsel %vm55, %v45, %v48
    %v68 = vsel %vm58, %v54, 1326507024
    %v69 = vsel %vm57, %v51, %v68
    %v70 = vsel %vm56, %v67, %v69
    %v71 = vshll.u32 %v31, 8
    %v72 = vmul.u32.u64.compose %v71, %v70
    %v73 = vextract.low.u32 %v72
    %v74 = vextract.high.u32 %v72
    %v75 = vmul.u32.u64.compose %v71, %v66
    %v76 = vextract.low.u32 %v75
    %v77 = vextract.high.u32 %v75
    %v78 = vmul.u32 %v71, %v62
    %v79 = vadd.s32 %v74, %v76
    %vm80 = vc.u32 %v74, %v76
    %v81 = vadd.s32 %v77, 1
    %v82 = vsel %vm80, %v81, %v77
    %v83 = vadd.s32 %v78, %v82
    %v84 = vadd.s32 %v83, 536870912
    %v85 = vshrl.u32 %v84, 30
    %v86 = vshll.u32 %v85, 30
    %v87 = vsub.s32 %v83, %v86
    %vm88 = vcmp.lt.s32.totalorder %v87, 0
    %v89 = vsub.s32 0, %v87
    %v90 = vsel %vm88, %v89, %v87
    %v91 = vclz %v90
    %v92 = vsub.s32 %v91, 2
    %vm93 = vcmp.gt.s32.totalorder 0, %v92
    %v94 = vsel %vm93, 0, %v92
    %v95 = vsub.s32 32, %v94
    %v96 = vshll.u32 %v87, %v94
    %v97 = vshrl.u32 %v79, %v95
    %v98 = vor.u32 %v96, %v97
    %v99 = vsub.s32 4294967266, %v94
    %v100 = vadd.s32 %v99, 127
    %v101 = vshll.u32 %v100, 23
    %v102 = vor.u32 4788187, %v101
    %v103 = vand.u32 2147483647, %v102
    %v105 = vcvt.s32.f32 %v98
    %v106 = vmul.f32 %v105, %v103
    %v107 = vxor.u32 %v106, 2147483648
    %v108 = vsel %vm25, %v107, %v106
    %v109 = vsub.s32 4, %v85
    %v110 = vsel %vm25, %v109, %v85
    %v111 = vsel %vm24, %v22, %v108
    %v112 = vsel %vm24, 0, %v110
    %v113 = vcosq.f32.pop %v111
    %v114 = vsinq.f32.pop %v111
    %vm115 = vweird.f32 %v22
    %v116 = vadd.s32 %v112, 3
    %v117 = vand.u32 %v116, 3
    %vm118 = vcmp.lt.s32.totalorder %v117, 2
    %vm119 = vcmp.eq.s32.totalorder %v117, 0
    %v120 = vxor.u32 %v114, 2147483648
    %v121 = vsel %vm119, %v113, %v120
    %vm122 = vcmp.eq.s32.totalorder %v117, 2
    %v123 = vxor.u32 %v113, 2147483648
    %v124 = vsel %vm122, %v123, %v114
    %v125 = vsel %vm118, %v121, %v124
    %v126 = vsel %vm115, nan, %v125
    %v127 = vsel %vm16, 1, 0
    %128 = vset.pattern.permute.xlu0 0
    %129 = vperm.xlu0 %128, %v127
    %v130 = vpop.permute.xlu0 %129
    %vm131 = vcmp.eq.s32.totalorder %v130, 1
    %v132 = vsel %vm131, %v126, 0.0
    %v133 = vand.u32 2147483647, %v22
    %vm134 = vcmp.le.f32.partialorder %v133, 0.7853982
    %vm135 = vcmp.lt.s32.totalorder %v22, 0
    %v136 = vand.u32 %v22, 2139095040
    %v137 = vshrl.u32 %v136, 23
    %v138 = vsub.s32 %v137, 127
    %v139 = vand.u32 2147483647, %v22
    %v140 = vand.u32 %v139, 8388607
    %v141 = vor.u32 %v140, 8388608
    %v142 = vsub.s32 0, %v141
    %v143 = vadd.s32 %v138, 1
    %vm144 = vcmp.gt.s32.totalorder %v143, 0
    %v145 = vsel %vm144, %v143, 0
    %v146 = vshrl.u32 %v145, 5
    %v147 = vand.u32 %v145, 31
    %v148 = vsub.s32 32, %v147
    %v149 = vshrl.u32 683565275, %v148
    %v150 = vshll.u32 683565275, %v147
    %v151 = vshrl.u32 2475754826, %v148
    %v152 = vor.u32 %v150, %v151
    %v153 = vshll.u32 2475754826, %v147
    %v154 = vshrl.u32 2131351028, %v148
    %v155 = vor.u32 %v153, %v154
    %v156 = vshll.u32 2131351028, %v147
    %v157 = vshrl.u32 2102212464, %v148
    %v158 = vor.u32 %v156, %v157
    %v159 = vshll.u32 2102212464, %v147
    %v160 = vshrl.u32 920167782, %v148
    %v161 = vor.u32 %v159, %v160
    %v162 = vshll.u32 920167782, %v147
    %v163 = vshrl.u32 1326507024, %v148
    %v164 = vor.u32 %v162, %v163
    %vm165 = vcmp.lt.s32.totalorder %v146, 1
    %vm166 = vcmp.lt.s32.totalorder %v146, 2
    %vm167 = vcmp.lt.s32.totalorder %v146, 3
    %vm168 = vcmp.lt.s32.totalorder %v146, 4
    %v169 = vsel %vm165, %v149, %v152
    %v170 = vsel %vm168, %v158, 2102212464
    %v171 = vsel %vm167, %v155, %v170
    %v172 = vsel %vm166, %v169, %v171
    %v173 = vsel %vm165, %v152, %v155
    %v174 = vsel %vm168, %v161, 920167782
    %v175 = vsel %vm167, %v158, %v174
    %v176 = vsel %vm166, %v173, %v175
    %v177 = vsel %vm165, %v155, %v158
    %v178 = vsel %vm168, %v164, 1326507024
    %v179 = vsel %vm167, %v161, %v178
    %v180 = vsel %vm166, %v177, %v179
    %v181 = vshll.u32 %v141, 8
    %v182 = vmul.u32.u64.compose %v181, %v180
    %v183 = vextract.low.u32 %v182
    %v184 = vextract.high.u32 %v182
    %v185 = vmul.u32.u64.compose %v181, %v176
    %v186 = vextract.low.u32 %v185
    %v187 = vextract.high.u32 %v185
    %v188 = vmul.u32 %v181, %v172
    %v189 = vadd.s32 %v184, %v186
    %vm190 = vc.u32 %v184, %v186
    %v191 = vadd.s32 %v187, 1
    %v192 = vsel %vm190, %v191, %v187
    %v193 = vadd.s32 %v188, %v192
    %v194 = vadd.s32 %v193, 536870912
    %v195 = vshrl.u32 %v194, 30
    %v196 = vshll.u32 %v195, 30
    %v197 = vsub.s32 %v193, %v196
    %vm198 = vcmp.lt.s32.totalorder %v197, 0
    %v199 = vsub.s32 0, %v197
    %v200 = vsel %vm198, %v199, %v197
    %v201 = vclz %v200
    %v202 = vsub.s32 %v201, 2
    %vm203 = vcmp.gt.s32.totalorder 0, %v202
    %v204 = vsel %vm203, 0, %v202
    %v205 = vsub.s32 32, %v204
    %v206 = vshll.u32 %v197, %v204
    %v207 = vshrl.u32 %v189, %v205
    %v208 = vor.u32 %v206, %v207
    %v209 = vsub.s32 4294967266, %v204
    %v210 = vadd.s32 %v209, 127
    %v211 = vshll.u32 %v210, 23
    %v212 = vor.u32 4788187, %v211
    %v213 = vand.u32 2147483647, %v212
    %v215 = vcvt.s32.f32 %v208
    %v216 = vmul.f32 %v215, %v213
    %v217 = vxor.u32 %v216, 2147483648
    %v218 = vsel %vm135, %v217, %v216
    %v219 = vsub.s32 4, %v195
    %v220 = vsel %vm135, %v219, %v195
    %v221 = vsel %vm134, %v22, %v218
    %v222 = vsel %vm134, 0, %v220
    %v223 = vcosq.f32.pop %v221
    %v224 = vsinq.f32.pop %v221
    %vm225 = vweird.f32 %v22
    %v226 = vand.u32 %v222, 3
    %vm227 = vcmp.lt.s32.totalorder %v226, 2
    %vm228 = vcmp.eq.s32.totalorder %v226, 0
    %v229 = vxor.u32 %v224, 2147483648
    %v230 = vsel %vm228, %v223, %v229
    %vm231 = vcmp.eq.s32.totalorder %v226, 2
    %v232 = vxor.u32 %v223, 2147483648
    %v233 = vsel %vm231, %v232, %v224
    %v234 = vsel %vm227, %v230, %v233
    %v235 = vsel %vm225, nan, %v234
    %v236 = vsel %vm131, %v235, 0.0
    %vm237 = vcmask 130048
    %238 = vst.msk [vmem:[#allocation2] sm:$0xff] %vm237, %v132
    %240 = vrot.lane.b32.xlu0 %v236, 16
    %v241 = vpop.permute.xlu0 %240
    %vm243 = vcmask 261248
    %244 = vst.msk [vmem:[#allocation2] sm:$0xff] %vm243, %v241
    %v245 = vld [vmem:[%s0] sm:$0xff]
    %vm246 = vcmp.ne.f32.partialorder %v245, -10.0
    %248 = vset.pattern.permute.xlu0 1
    %249 = vperm.xlu0 %248, %v245
    %v250 = vpop.permute.xlu0 %249
    %v252 = vmul.f32 %v250, %v14
    %v253 = vand.u32 2147483647, %v252
    %vm254 = vcmp.le.f32.partialorder %v253, 0.7853982
    %vm255 = vcmp.lt.s32.totalorder %v252, 0
    %v256 = vand.u32 %v252, 2139095040
    %v257 = vshrl.u32 %v256, 23
    %v258 = vsub.s32 %v257, 127
    %v259 = vand.u32 2147483647, %v252
    %v260 = vand.u32 %v259, 8388607
    %v261 = vor.u32 %v260, 8388608
    %v262 = vsub.s32 0, %v261
    %v263 = vadd.s32 %v258, 1
    %vm264 = vcmp.gt.s32.totalorder %v263, 0
    %v265 = vsel %vm264, %v263, 0
    %v266 = vshrl.u32 %v265, 5
    %v267 = vand.u32 %v265, 31
    %v268 = vsub.s32 32, %v267
    %v269 = vshrl.u32 683565275, %v268
    %v270 = vshll.u32 683565275, %v267
    %v271 = vshrl.u32 2475754826, %v268
    %v272 = vor.u32 %v270, %v271
    %v273 = vshll.u32 2475754826, %v267
    %v274 = vshrl.u32 2131351028, %v268
    %v275 = vor.u32 %v273, %v274
    %v276 = vshll.u32 2131351028, %v267
    %v277 = vshrl.u32 2102212464, %v268
    %v278 = vor.u32 %v276, %v277
    %v279 = vshll.u32 2102212464, %v267
    %v280 = vshrl.u32 920167782, %v268
    %v281 = vor.u32 %v279, %v280
    %v282 = vshll.u32 920167782, %v267
    %v283 = vshrl.u32 1326507024, %v268
    %v284 = vor.u32 %v282, %v283
    %vm285 = vcmp.lt.s32.totalorder %v266, 1
    %vm286 = vcmp.lt.s32.totalorder %v266, 2
    %vm287 = vcmp.lt.s32.totalorder %v266, 3
    %vm288 = vcmp.lt.s32.totalorder %v266, 4
    %v289 = vsel %vm285, %v269, %v272
    %v290 = vsel %vm288, %v278, 2102212464
    %v291 = vsel %vm287, %v275, %v290
    %v292 = vsel %vm286, %v289, %v291
    %v293 = vsel %vm285, %v272, %v275
    %v294 = vsel %vm288, %v281, 920167782
    %v295 = vsel %vm287, %v278, %v294
    %v296 = vsel %vm286, %v293, %v295
    %v297 = vsel %vm285, %v275, %v278
    %v298 = vsel %vm288, %v284, 1326507024
    %v299 = vsel %vm287, %v281, %v298
    %v300 = vsel %vm286, %v297, %v299
    %v301 = vshll.u32 %v261, 8
    %v302 = vmul.u32.u64.compose %v301, %v300
    %v303 = vextract.low.u32 %v302
    %v304 = vextract.high.u32 %v302
    %v305 = vmul.u32.u64.compose %v301, %v296
    %v306 = vextract.low.u32 %v305
    %v307 = vextract.high.u32 %v305
    %v308 = vmul.u32 %v301, %v292
    %v309 = vadd.s32 %v304, %v306
    %vm310 = vc.u32 %v304, %v306
    %v311 = vadd.s32 %v307, 1
    %v312 = vsel %vm310, %v311, %v307
    %v313 = vadd.s32 %v308, %v312
    %v314 = vadd.s32 %v313, 536870912
    %v315 = vshrl.u32 %v314, 30
    %v316 = vshll.u32 %v315, 30
    %v317 = vsub.s32 %v313, %v316
    %vm318 = vcmp.lt.s32.totalorder %v317, 0
    %v319 = vsub.s32 0, %v317
    %v320 = vsel %vm318, %v319, %v317
    %v321 = vclz %v320
    %v322 = vsub.s32 %v321, 2
    %vm323 = vcmp.gt.s32.totalorder 0, %v322
    %v324 = vsel %vm323, 0, %v322
    %v325 = vsub.s32 32, %v324
    %v326 = vshll.u32 %v317, %v324
    %v327 = vshrl.u32 %v309, %v325
    %v328 = vor.u32 %v326, %v327
    %v329 = vsub.s32 4294967266, %v324
    %v330 = vadd.s32 %v329, 127
    %v331 = vshll.u32 %v330, 23
    %v332 = vor.u32 4788187, %v331
    %v333 = vand.u32 2147483647, %v332
    %v335 = vcvt.s32.f32 %v328
    %v336 = vmul.f32 %v335, %v333
    %v337 = vxor.u32 %v336, 2147483648
    %v338 = vsel %vm255, %v337, %v336
    %v339 = vsub.s32 4, %v315
    %v340 = vsel %vm255, %v339, %v315
    %v341 = vsel %vm254, %v252, %v338
    %v342 = vsel %vm254, 0, %v340
    %v343 = vcosq.f32.pop %v341
    %v344 = vsinq.f32.pop %v341
    %vm345 = vweird.f32 %v252
    %v346 = vadd.s32 %v342, 3
    %v347 = vand.u32 %v346, 3
    %vm348 = vcmp.lt.s32.totalorder %v347, 2
    %vm349 = vcmp.eq.s32.totalorder %v347, 0
    %v350 = vxor.u32 %v344, 2147483648
    %v351 = vsel %vm349, %v343, %v350
    %vm352 = vcmp.eq.s32.totalorder %v347, 2
    %v353 = vxor.u32 %v343, 2147483648
    %v354 = vsel %vm352, %v353, %v344
    %v355 = vsel %vm348, %v351, %v354
    %v356 = vsel %vm345, nan, %v355
    %v357 = vsel %vm246, 1, 0
    %358 = vset.pattern.permute.xlu0 1
    %359 = vperm.xlu0 %358, %v357
    %v360 = vpop.permute.xlu0 %359
    %vm361 = vcmp.eq.s32.totalorder %v360, 1
    %v362 = vsel %vm361, %v356, 0.0
    %v363 = vand.u32 2147483647, %v252
    %vm364 = vcmp.le.f32.partialorder %v363, 0.7853982
    %vm365 = vcmp.lt.s32.totalorder %v252, 0
    %v366 = vand.u32 %v252, 2139095040
    %v367 = vshrl.u32 %v366, 23
    %v368 = vsub.s32 %v367, 127
    %v369 = vand.u32 2147483647, %v252
    %v370 = vand.u32 %v369, 8388607
    %v371 = vor.u32 %v370, 8388608
    %v372 = vsub.s32 0, %v371
    %v373 = vadd.s32 %v368, 1
    %vm374 = vcmp.gt.s32.totalorder %v373, 0
    %v375 = vsel %vm374, %v373, 0
    %v376 = vshrl.u32 %v375, 5
    %v377 = vand.u32 %v375, 31
    %v378 = vsub.s32 32, %v377
    %v379 = vshrl.u32 683565275, %v378
    %v380 = vshll.u32 683565275, %v377
    %v381 = vshrl.u32 2475754826, %v378
    %v382 = vor.u32 %v380, %v381
    %v383 = vshll.u32 2475754826, %v377
    %v384 = vshrl.u32 2131351028, %v378
    %v385 = vor.u32 %v383, %v384
    %v386 = vshll.u32 2131351028, %v377
    %v387 = vshrl.u32 2102212464, %v378
    %v388 = vor.u32 %v386, %v387
    %v389 = vshll.u32 2102212464, %v377
    %v390 = vshrl.u32 920167782, %v378
    %v391 = vor.u32 %v389, %v390
    %v392 = vshll.u32 920167782, %v377
    %v393 = vshrl.u32 1326507024, %v378
    %v394 = vor.u32 %v392, %v393
    %vm395 = vcmp.lt.s32.totalorder %v376, 1
    %vm396 = vcmp.lt.s32.totalorder %v376, 2
    %vm397 = vcmp.lt.s32.totalorder %v376, 3
    %vm398 = vcmp.lt.s32.totalorder %v376, 4
    %v399 = vsel %vm395, %v379, %v382
    %v400 = vsel %vm398, %v388, 2102212464
    %v401 = vsel %vm397, %v385, %v400
    %v402 = vsel %vm396, %v399, %v401
    %v403 = vsel %vm395, %v382, %v385
    %v404 = vsel %vm398, %v391, 920167782
    %v405 = vsel %vm397, %v388, %v404
    %v406 = vsel %vm396, %v403, %v405
    %v407 = vsel %vm395, %v385, %v388
    %v408 = vsel %vm398, %v394, 1326507024
    %v409 = vsel %vm397, %v391, %v408
    %v410 = vsel %vm396, %v407, %v409
    %v411 = vshll.u32 %v371, 8
    %v412 = vmul.u32.u64.compose %v411, %v410
    %v413 = vextract.low.u32 %v412
    %v414 = vextract.high.u32 %v412
    %v415 = vmul.u32.u64.compose %v411, %v406
    %v416 = vextract.low.u32 %v415
    %v417 = vextract.high.u32 %v415
    %v418 = vmul.u32 %v411, %v402
    %v419 = vadd.s32 %v414, %v416
    %vm420 = vc.u32 %v414, %v416
    %v421 = vadd.s32 %v417, 1
    %v422 = vsel %vm420, %v421, %v417
    %v423 = vadd.s32 %v418, %v422
    %v424 = vadd.s32 %v423, 536870912
    %v425 = vshrl.u32 %v424, 30
    %v426 = vshll.u32 %v425, 30
    %v427 = vsub.s32 %v423, %v426
    %vm428 = vcmp.lt.s32.totalorder %v427, 0
    %v429 = vsub.s32 0, %v427
    %v430 = vsel %vm428, %v429, %v427
    %v431 = vclz %v430
    %v432 = vsub.s32 %v431, 2
    %vm433 = vcmp.gt.s32.totalorder 0, %v432
    %v434 = vsel %vm433, 0, %v432
    %v435 = vsub.s32 32, %v434
    %v436 = vshll.u32 %v427, %v434
    %v437 = vshrl.u32 %v419, %v435
    %v438 = vor.u32 %v436, %v437
    %v439 = vsub.s32 4294967266, %v434
    %v440 = vadd.s32 %v439, 127
    %v441 = vshll.u32 %v440, 23
    %v442 = vor.u32 4788187, %v441
    %v443 = vand.u32 2147483647, %v442
    %v445 = vcvt.s32.f32 %v438
    %v446 = vmul.f32 %v445, %v443
    %v447 = vxor.u32 %v446, 2147483648
    %v448 = vsel %vm365, %v447, %v446
    %v449 = vsub.s32 4, %v425
    %v450 = vsel %vm365, %v449, %v425
    %v451 = vsel %vm364, %v252, %v448
    %v452 = vsel %vm364, 0, %v450
    %v453 = vcosq.f32.pop %v451
    %v454 = vsinq.f32.pop %v451
    %vm455 = vweird.f32 %v252
    %v456 = vand.u32 %v452, 3
    %vm457 = vcmp.lt.s32.totalorder %v456, 2
    %vm458 = vcmp.eq.s32.totalorder %v456, 0
    %v459 = vxor.u32 %v454, 2147483648
    %v460 = vsel %vm458, %v453, %v459
    %vm461 = vcmp.eq.s32.totalorder %v456, 2
    %v462 = vxor.u32 %v453, 2147483648
    %v463 = vsel %vm461, %v462, %v454
    %v464 = vsel %vm457, %v460, %v463
    %v465 = vsel %vm455, nan, %v464
    %v466 = vsel %vm361, %v465, 0.0
    %468 = vrot.lane.b32.xlu0 %v362, 32
    %v469 = vpop.permute.xlu0 %468
    %vm471 = vcmask 392448
    %472 = vst.msk [vmem:[#allocation2] sm:$0xff] %vm471, %v469
    %474 = vrot.lane.b32.xlu0 %v466, 48
    %v475 = vpop.permute.xlu0 %474
    %vm477 = vcmask 523648
    %478 = vst.msk [vmem:[#allocation2] sm:$0xff] %vm477, %v475
    %v479 = vld [vmem:[%s0] sm:$0xff]
    %vm480 = vcmp.ne.f32.partialorder %v479, -10.0
    %482 = vset.pattern.permute.xlu0 2
    %483 = vperm.xlu0 %482, %v479
    %v484 = vpop.permute.xlu0 %483
    %v486 = vmul.f32 %v484, %v14
    %v487 = vand.u32 2147483647, %v486
    %vm488 = vcmp.le.f32.partialorder %v487, 0.7853982
    %vm489 = vcmp.lt.s32.totalorder %v486, 0
    %v490 = vand.u32 %v486, 2139095040
    %v491 = vshrl.u32 %v490, 23
    %v492 = vsub.s32 %v491, 127
    %v493 = vand.u32 2147483647, %v486
    %v494 = vand.u32 %v493, 8388607
    %v495 = vor.u32 %v494, 8388608
    %v496 = vsub.s32 0, %v495
    %v497 = vadd.s32 %v492, 1
    %vm498 = vcmp.gt.s32.totalorder %v497, 0
    %v499 = vsel %vm498, %v497, 0
    %v500 = vshrl.u32 %v499, 5
    %v501 = vand.u32 %v499, 31
    %v502 = vsub.s32 32, %v501
    %v503 = vshrl.u32 683565275, %v502
    %v504 = vshll.u32 683565275, %v501
    %v505 = vshrl.u32 2475754826, %v502
    %v506 = vor.u32 %v504, %v505
    %v507 = vshll.u32 2475754826, %v501
    %v508 = vshrl.u32 2131351028, %v502
    %v509 = vor.u32 %v507, %v508
    %v510 = vshll.u32 2131351028, %v501
    %v511 = vshrl.u32 2102212464, %v502
    %v512 = vor.u32 %v510, %v511
    %v513 = vshll.u32 2102212464, %v501
    %v514 = vshrl.u32 920167782, %v502
    %v515 = vor.u32 %v513, %v514
    %v516 = vshll.u32 920167782, %v501
    %v517 = vshrl.u32 1326507024, %v502
    %v518 = vor.u32 %v516, %v517
    %vm519 = vcmp.lt.s32.totalorder %v500, 1
    %vm520 = vcmp.lt.s32.totalorder %v500, 2
    %vm521 = vcmp.lt.s32.totalorder %v500, 3
    %vm522 = vcmp.lt.s32.totalorder %v500, 4
    %v523 = vsel %vm519, %v503, %v506
    %v524 = vsel %vm522, %v512, 2102212464
    %v525 = vsel %vm521, %v509, %v524
    %v526 = vsel %vm520, %v523, %v525
    %v527 = vsel %vm519, %v506, %v509
    %v528 = vsel %vm522, %v515, 920167782
    %v529 = vsel %vm521, %v512, %v528
    %v530 = vsel %vm520, %v527, %v529
    %v531 = vsel %vm519, %v509, %v512
    %v532 = vsel %vm522, %v518, 1326507024
    %v533 = vsel %vm521, %v515, %v532
    %v534 = vsel %vm520, %v531, %v533
    %v535 = vshll.u32 %v495, 8
    %v536 = vmul.u32.u64.compose %v535, %v534
    %v537 = vextract.low.u32 %v536
    %v538 = vextract.high.u32 %v536
    %v539 = vmul.u32.u64.compose %v535, %v530
    %v540 = vextract.low.u32 %v539
    %v541 = vextract.high.u32 %v539
    %v542 = vmul.u32 %v535, %v526
    %v543 = vadd.s32 %v538, %v540
    %vm544 = vc.u32 %v538, %v540
    %v545 = vadd.s32 %v541, 1
    %v546 = vsel %vm544, %v545, %v541
    %v547 = vadd.s32 %v542, %v546
    %v548 = vadd.s32 %v547, 536870912
    %v549 = vshrl.u32 %v548, 30
    %v550 = vshll.u32 %v549, 30
    %v551 = vsub.s32 %v547, %v550
    %vm552 = vcmp.lt.s32.totalorder %v551, 0
    %v553 = vsub.s32 0, %v551
    %v554 = vsel %vm552, %v553, %v551
    %v555 = vclz %v554
    %v556 = vsub.s32 %v555, 2
    %vm557 = vcmp.gt.s32.totalorder 0, %v556
    %v558 = vsel %vm557, 0, %v556
    %v559 = vsub.s32 32, %v558
    %v560 = vshll.u32 %v551, %v558
    %v561 = vshrl.u32 %v543, %v559
    %v562 = vor.u32 %v560, %v561
    %v563 = vsub.s32 4294967266, %v558
    %v564 = vadd.s32 %v563, 127
    %v565 = vshll.u32 %v564, 23
    %v566 = vor.u32 4788187, %v565
    %v567 = vand.u32 2147483647, %v566
    %v569 = vcvt.s32.f32 %v562
    %v570 = vmul.f32 %v569, %v567
    %v571 = vxor.u32 %v570, 2147483648
    %v572 = vsel %vm489, %v571, %v570
    %v573 = vsub.s32 4, %v549
    %v574 = vsel %vm489, %v573, %v549
    %v575 = vsel %vm488, %v486, %v572
    %v576 = vsel %vm488, 0, %v574
    %v577 = vcosq.f32.pop %v575
    %v578 = vsinq.f32.pop %v575
    %vm579 = vweird.f32 %v486
    %v580 = vadd.s32 %v576, 3
    %v581 = vand.u32 %v580, 3
    %vm582 = vcmp.lt.s32.totalorder %v581, 2
    %vm583 = vcmp.eq.s32.totalorder %v581, 0
    %v584 = vxor.u32 %v578, 2147483648
    %v585 = vsel %vm583, %v577, %v584
    %vm586 = vcmp.eq.s32.totalorder %v581, 2
    %v587 = vxor.u32 %v577, 2147483648
    %v588 = vsel %vm586, %v587, %v578
    %v589 = vsel %vm582, %v585, %v588
    %v590 = vsel %vm579, nan, %v589
    %v591 = vsel %vm480, 1, 0
    %592 = vset.pattern.permute.xlu0 2
    %593 = vperm.xlu0 %592, %v591
    %v594 = vpop.permute.xlu0 %593
    %vm595 = vcmp.eq.s32.totalorder %v594, 1
    %v596 = vsel %vm595, %v590, 0.0
    %v597 = vand.u32 2147483647, %v486
    %vm598 = vcmp.le.f32.partialorder %v597, 0.7853982
    %vm599 = vcmp.lt.s32.totalorder %v486, 0
    %v600 = vand.u32 %v486, 2139095040
    %v601 = vshrl.u32 %v600, 23
    %v602 = vsub.s32 %v601, 127
    %v603 = vand.u32 2147483647, %v486
    %v604 = vand.u32 %v603, 8388607
    %v605 = vor.u32 %v604, 8388608
    %v606 = vsub.s32 0, %v605
    %v607 = vadd.s32 %v602, 1
    %vm608 = vcmp.gt.s32.totalorder %v607, 0
    %v609 = vsel %vm608, %v607, 0
    %v610 = vshrl.u32 %v609, 5
    %v611 = vand.u32 %v609, 31
    %v612 = vsub.s32 32, %v611
    %v613 = vshrl.u32 683565275, %v612
    %v614 = vshll.u32 683565275, %v611
    %v615 = vshrl.u32 2475754826, %v612
    %v616 = vor.u32 %v614, %v615
    %v617 = vshll.u32 2475754826, %v611
    %v618 = vshrl.u32 2131351028, %v612
    %v619 = vor.u32 %v617, %v618
    %v620 = vshll.u32 2131351028, %v611
    %v621 = vshrl.u32 2102212464, %v612
    %v622 = vor.u32 %v620, %v621
    %v623 = vshll.u32 2102212464, %v611
    %v624 = vshrl.u32 920167782, %v612
    %v625 = vor.u32 %v623, %v624
    %v626 = vshll.u32 920167782, %v611
    %v627 = vshrl.u32 1326507024, %v612
    %v628 = vor.u32 %v626, %v627
    %vm629 = vcmp.lt.s32.totalorder %v610, 1
    %vm630 = vcmp.lt.s32.totalorder %v610, 2
    %vm631 = vcmp.lt.s32.totalorder %v610, 3
    %vm632 = vcmp.lt.s32.totalorder %v610, 4
    %v633 = vsel %vm629, %v613, %v616
    %v634 = vsel %vm632, %v622, 2102212464
    %v635 = vsel %vm631, %v619, %v634
    %v636 = vsel %vm630, %v633, %v635
    %v637 = vsel %vm629, %v616, %v619
    %v638 = vsel %vm632, %v625, 920167782
    %v639 = vsel %vm631, %v622, %v638
    %v640 = vsel %vm630, %v637, %v639
    %v641 = vsel %vm629, %v619, %v622
    %v642 = vsel %vm632, %v628, 1326507024
    %v643 = vsel %vm631, %v625, %v642
    %v644 = vsel %vm630, %v641, %v643
    %v645 = vshll.u32 %v605, 8
    %v646 = vmul.u32.u64.compose %v645, %v644
    %v647 = vextract.low.u32 %v646
    %v648 = vextract.high.u32 %v646
    %v649 = vmul.u32.u64.compose %v645, %v640
    %v650 = vextract.low.u32 %v649
    %v651 = vextract.high.u32 %v649
    %v652 = vmul.u32 %v645, %v636
    %v653 = vadd.s32 %v648, %v650
    %vm654 = vc.u32 %v648, %v650
    %v655 = vadd.s32 %v651, 1
    %v656 = vsel %vm654, %v655, %v651
    %v657 = vadd.s32 %v652, %v656
    %v658 = vadd.s32 %v657, 536870912
    %v659 = vshrl.u32 %v658, 30
    %v660 = vshll.u32 %v659, 30
    %v661 = vsub.s32 %v657, %v660
    %vm662 = vcmp.lt.s32.totalorder %v661, 0
    %v663 = vsub.s32 0, %v661
    %v664 = vsel %vm662, %v663, %v661
    %v665 = vclz %v664
    %v666 = vsub.s32 %v665, 2
    %vm667 = vcmp.gt.s32.totalorder 0, %v666
    %v668 = vsel %vm667, 0, %v666
    %v669 = vsub.s32 32, %v668
    %v670 = vshll.u32 %v661, %v668
    %v671 = vshrl.u32 %v653, %v669
    %v672 = vor.u32 %v670, %v671
    %v673 = vsub.s32 4294967266, %v668
    %v674 = vadd.s32 %v673, 127
    %v675 = vshll.u32 %v674, 23
    %v676 = vor.u32 4788187, %v675
    %v677 = vand.u32 2147483647, %v676
    %v679 = vcvt.s32.f32 %v672
    %v680 = vmul.f32 %v679, %v677
    %v681 = vxor.u32 %v680, 2147483648
    %v682 = vsel %vm599, %v681, %v680
    %v683 = vsub.s32 4, %v659
    %v684 = vsel %vm599, %v683, %v659
    %v685 = vsel %vm598, %v486, %v682
    %v686 = vsel %vm598, 0, %v684
    %v687 = vcosq.f32.pop %v685
    %v688 = vsinq.f32.pop %v685
    %vm689 = vweird.f32 %v486
    %v690 = vand.u32 %v686, 3
    %vm691 = vcmp.lt.s32.totalorder %v690, 2
    %vm692 = vcmp.eq.s32.totalorder %v690, 0
    %v693 = vxor.u32 %v688, 2147483648
    %v694 = vsel %vm692, %v687, %v693
    %vm695 = vcmp.eq.s32.totalorder %v690, 2
    %v696 = vxor.u32 %v687, 2147483648
    %v697 = vsel %vm695, %v696, %v688
    %v698 = vsel %vm691, %v694, %v697
    %v699 = vsel %vm689, nan, %v698
    %v700 = vsel %vm595, %v699, 0.0
    %702 = vrot.lane.b32.xlu0 %v596, 64
    %v703 = vpop.permute.xlu0 %702
    %vm705 = vcmask 654848
    %706 = vst.msk [vmem:[#allocation2] sm:$0xff] %vm705, %v703
    %708 = vrot.lane.b32.xlu0 %v700, 80
    %v709 = vpop.permute.xlu0 %708
    %vm711 = vcmask 786048
    %712 = vst.msk [vmem:[#allocation2] sm:$0xff] %vm711, %v709
    %v713 = vld [vmem:[%s0] sm:$0xff]
    %vm714 = vcmp.ne.f32.partialorder %v713, -10.0
    %716 = vset.pattern.permute.xlu0 3
    %717 = vperm.xlu0 %716, %v713
    %v718 = vpop.permute.xlu0 %717
    %v720 = vmul.f32 %v718, %v14
    %v721 = vand.u32 2147483647, %v720
    %vm722 = vcmp.le.f32.partialorder %v721, 0.7853982
    %vm723 = vcmp.lt.s32.totalorder %v720, 0
    %v724 = vand.u32 %v720, 2139095040
    %v725 = vshrl.u32 %v724, 23
    %v726 = vsub.s32 %v725, 127
    %v727 = vand.u32 2147483647, %v720
    %v728 = vand.u32 %v727, 8388607
    %v729 = vor.u32 %v728, 8388608
    %v730 = vsub.s32 0, %v729
    %v731 = vadd.s32 %v726, 1
    %vm732 = vcmp.gt.s32.totalorder %v731, 0
    %v733 = vsel %vm732, %v731, 0
    %v734 = vshrl.u32 %v733, 5
    %v735 = vand.u32 %v733, 31
    %v736 = vsub.s32 32, %v735
    %v737 = vshrl.u32 683565275, %v736
    %v738 = vshll.u32 683565275, %v735
    %v739 = vshrl.u32 2475754826, %v736
    %v740 = vor.u32 %v738, %v739
    %v741 = vshll.u32 2475754826, %v735
    %v742 = vshrl.u32 2131351028, %v736
    %v743 = vor.u32 %v741, %v742
    %v744 = vshll.u32 2131351028, %v735
    %v745 = vshrl.u32 2102212464, %v736
    %v746 = vor.u32 %v744, %v745
    %v747 = vshll.u32 2102212464, %v735
    %v748 = vshrl.u32 920167782, %v736
    %v749 = vor.u32 %v747, %v748
    %v750 = vshll.u32 920167782, %v735
    %v751 = vshrl.u32 1326507024, %v736
    %v752 = vor.u32 %v750, %v751
    %vm753 = vcmp.lt.s32.totalorder %v734, 1
    %vm754 = vcmp.lt.s32.totalorder %v734, 2
    %vm755 = vcmp.lt.s32.totalorder %v734, 3
    %vm756 = vcmp.lt.s32.totalorder %v734, 4
    %v757 = vsel %vm753, %v737, %v740
    %v758 = vsel %vm756, %v746, 2102212464
    %v759 = vsel %vm755, %v743, %v758
    %v760 = vsel %vm754, %v757, %v759
    %v761 = vsel %vm753, %v740, %v743
    %v762 = vsel %vm756, %v749, 920167782
    %v763 = vsel %vm755, %v746, %v762
    %v764 = vsel %vm754, %v761, %v763
    %v765 = vsel %vm753, %v743, %v746
    %v766 = vsel %vm756, %v752, 1326507024
    %v767 = vsel %vm755, %v749, %v766
    %v768 = vsel %vm754, %v765, %v767
    %v769 = vshll.u32 %v729, 8
    %v770 = vmul.u32.u64.compose %v769, %v768
    %v771 = vextract.low.u32 %v770
    %v772 = vextract.high.u32 %v770
    %v773 = vmul.u32.u64.compose %v769, %v764
    %v774 = vextract.low.u32 %v773
    %v775 = vextract.high.u32 %v773
    %v776 = vmul.u32 %v769, %v760
    %v777 = vadd.s32 %v772, %v774
    %vm778 = vc.u32 %v772, %v774
    %v779 = vadd.s32 %v775, 1
    %v780 = vsel %vm778, %v779, %v775
    %v781 = vadd.s32 %v776, %v780
    %v782 = vadd.s32 %v781, 536870912
    %v783 = vshrl.u32 %v782, 30
    %v784 = vshll.u32 %v783, 30
    %v785 = vsub.s32 %v781, %v784
    %vm786 = vcmp.lt.s32.totalorder %v785, 0
    %v787 = vsub.s32 0, %v785
    %v788 = vsel %vm786, %v787, %v785
    %v789 = vclz %v788
    %v790 = vsub.s32 %v789, 2
    %vm791 = vcmp.gt.s32.totalorder 0, %v790
    %v792 = vsel %vm791, 0, %v790
    %v793 = vsub.s32 32, %v792
    %v794 = vshll.u32 %v785, %v792
    %v795 = vshrl.u32 %v777, %v793
    %v796 = vor.u32 %v794, %v795
    %v797 = vsub.s32 4294967266, %v792
    %v798 = vadd.s32 %v797, 127
    %v799 = vshll.u32 %v798, 23
    %v800 = vor.u32 4788187, %v799
    %v801 = vand.u32 2147483647, %v800
    %v803 = vcvt.s32.f32 %v796
    %v804 = vmul.f32 %v803, %v801
    %v805 = vxor.u32 %v804, 2147483648
    %v806 = vsel %vm723, %v805, %v804
    %v807 = vsub.s32 4, %v783
    %v808 = vsel %vm723, %v807, %v783
    %v809 = vsel %vm722, %v720, %v806
    %v810 = vsel %vm722, 0, %v808
    %v811 = vcosq.f32.pop %v809
    %v812 = vsinq.f32.pop %v809
    %vm813 = vweird.f32 %v720
    %v814 = vadd.s32 %v810, 3
    %v815 = vand.u32 %v814, 3
    %vm816 = vcmp.lt.s32.totalorder %v815, 2
    %vm817 = vcmp.eq.s32.totalorder %v815, 0
    %v818 = vxor.u32 %v812, 2147483648
    %v819 = vsel %vm817, %v811, %v818
    %vm820 = vcmp.eq.s32.totalorder %v815, 2
    %v821 = vxor.u32 %v811, 2147483648
    %v822 = vsel %vm820, %v821, %v812
    %v823 = vsel %vm816, %v819, %v822
    %v824 = vsel %vm813, nan, %v823
    %v825 = vsel %vm714, 1, 0
    %826 = vset.pattern.permute.xlu0 3
    %827 = vperm.xlu0 %826, %v825
    %v828 = vpop.permute.xlu0 %827
    %vm829 = vcmp.eq.s32.totalorder %v828, 1
    %v830 = vsel %vm829, %v824, 0.0
    %v831 = vand.u32 2147483647, %v720
    %vm832 = vcmp.le.f32.partialorder %v831, 0.7853982
    %vm833 = vcmp.lt.s32.totalorder %v720, 0
    %v834 = vand.u32 %v720, 2139095040
    %v835 = vshrl.u32 %v834, 23
    %v836 = vsub.s32 %v835, 127
    %v837 = vand.u32 2147483647, %v720
    %v838 = vand.u32 %v837, 8388607
    %v839 = vor.u32 %v838, 8388608
    %v840 = vsub.s32 0, %v839
    %v841 = vadd.s32 %v836, 1
    %vm842 = vcmp.gt.s32.totalorder %v841, 0
    %v843 = vsel %vm842, %v841, 0
    %v844 = vshrl.u32 %v843, 5
    %v845 = vand.u32 %v843, 31
    %v846 = vsub.s32 32, %v845
    %v847 = vshrl.u32 683565275, %v846
    %v848 = vshll.u32 683565275, %v845
    %v849 = vshrl.u32 2475754826, %v846
    %v850 = vor.u32 %v848, %v849
    %v851 = vshll.u32 2475754826, %v845
    %v852 = vshrl.u32 2131351028, %v846
    %v853 = vor.u32 %v851, %v852
    %v854 = vshll.u32 2131351028, %v845
    %v855 = vshrl.u32 2102212464, %v846
    %v856 = vor.u32 %v854, %v855
    %v857 = vshll.u32 2102212464, %v845
    %v858 = vshrl.u32 920167782, %v846
    %v859 = vor.u32 %v857, %v858
    %v860 = vshll.u32 920167782, %v845
    %v861 = vshrl.u32 1326507024, %v846
    %v862 = vor.u32 %v860, %v861
    %vm863 = vcmp.lt.s32.totalorder %v844, 1
    %vm864 = vcmp.lt.s32.totalorder %v844, 2
    %vm865 = vcmp.lt.s32.totalorder %v844, 3
    %vm866 = vcmp.lt.s32.totalorder %v844, 4
    %v867 = vsel %vm863, %v847, %v850
    %v868 = vsel %vm866, %v856, 2102212464
    %v869 = vsel %vm865, %v853, %v868
    %v870 = vsel %vm864, %v867, %v869
    %v871 = vsel %vm863, %v850, %v853
    %v872 = vsel %vm866, %v859, 920167782
    %v873 = vsel %vm865, %v856, %v872
    %v874 = vsel %vm864, %v871, %v873
    %v875 = vsel %vm863, %v853, %v856
    %v876 = vsel %vm866, %v862, 1326507024
    %v877 = vsel %vm865, %v859, %v876
    %v878 = vsel %vm864, %v875, %v877
    %v879 = vshll.u32 %v839, 8
    %v880 = vmul.u32.u64.compose %v879, %v878
    %v881 = vextract.low.u32 %v880
    %v882 = vextract.high.u32 %v880
    %v883 = vmul.u32.u64.compose %v879, %v874
    %v884 = vextract.low.u32 %v883
    %v885 = vextract.high.u32 %v883
    %v886 = vmul.u32 %v879, %v870
    %v887 = vadd.s32 %v882, %v884
    %vm888 = vc.u32 %v882, %v884
    %v889 = vadd.s32 %v885, 1
    %v890 = vsel %vm888, %v889, %v885
    %v891 = vadd.s32 %v886, %v890
    %v892 = vadd.s32 %v891, 536870912
    %v893 = vshrl.u32 %v892, 30
    %v894 = vshll.u32 %v893, 30
    %v895 = vsub.s32 %v891, %v894
    %vm896 = vcmp.lt.s32.totalorder %v895, 0
    %v897 = vsub.s32 0, %v895
    %v898 = vsel %vm896, %v897, %v895
    %v899 = vclz %v898
    %v900 = vsub.s32 %v899, 2
    %vm901 = vcmp.gt.s32.totalorder 0, %v900
    %v902 = vsel %vm901, 0, %v900
    %v903 = vsub.s32 32, %v902
    %v904 = vshll.u32 %v895, %v902
    %v905 = vshrl.u32 %v887, %v903
    %v906 = vor.u32 %v904, %v905
    %v907 = vsub.s32 4294967266, %v902
    %v908 = vadd.s32 %v907, 127
    %v909 = vshll.u32 %v908, 23
    %v910 = vor.u32 4788187, %v909
    %v911 = vand.u32 2147483647, %v910
    %v913 = vcvt.s32.f32 %v906
    %v914 = vmul.f32 %v913, %v911
    %v915 = vxor.u32 %v914, 2147483648
    %v916 = vsel %vm833, %v915, %v914
    %v917 = vsub.s32 4, %v893
    %v918 = vsel %vm833, %v917, %v893
    %v919 = vsel %vm832, %v720, %v916
    %v920 = vsel %vm832, 0, %v918
    %v921 = vcosq.f32.pop %v919
    %v922 = vsinq.f32.pop %v919
    %vm923 = vweird.f32 %v720
    %v924 = vand.u32 %v920, 3
    %vm925 = vcmp.lt.s32.totalorder %v924, 2
    %vm926 = vcmp.eq.s32.totalorder %v924, 0
    %v927 = vxor.u32 %v922, 2147483648
    %v928 = vsel %vm926, %v921, %v927
    %vm929 = vcmp.eq.s32.totalorder %v924, 2
    %v930 = vxor.u32 %v921, 2147483648
    %v931 = vsel %vm929, %v930, %v922
    %v932 = vsel %vm925, %v928, %v931
    %v933 = vsel %vm923, nan, %v932
    %v934 = vsel %vm829, %v933, 0.0
    %936 = vrot.lane.b32.xlu0 %v830, 96
    %v937 = vpop.permute.xlu0 %936
    %vm939 = vcmask 917248
    %940 = vst.msk [vmem:[#allocation2] sm:$0xff] %vm939, %v937
    %942 = vrot.lane.b32.xlu0 %v934, 112
    %v943 = vpop.permute.xlu0 %942
    %vm945 = vcmask 1048448
    %946 = vst.msk [vmem:[#allocation2] sm:$0xff] %vm945, %v943
    // Predicated region
    $region6: #{tpu_custom_call.1} parent=1 // pred_check
      _
    $region7: #{tpu_custom_call.1} parent=1 // pred_check_branch
      %948 = sbr.rel (0) target = $region9
    $region8: #{tpu_custom_call.1} parent=1 // pred_region
      %s950 = ssub.s32 128, 128
      %951 = vsyncadd [#allocation3], %s950
      %s953 = sshll.u32 [#allocation2], 4
      %s954 = int_to_ptr.vmem [resolvable:$true] %s953
      %956 = dma.vmem_to_hbm [thread:$0]  %s954, 128, %s1, [#allocation3]
    $region9: #{tpu_custom_call.1} parent=1 // pred_fallthru
      _
    // Predicated region
    $region10: #{tpu_custom_call.1} parent=1 // pred_check
      _
    $region11: #{tpu_custom_call.1} parent=1 // pred_check_branch
      %958 = sbr.rel (0) target = $region13
    $region12: #{tpu_custom_call.1} parent=1 // pred_region
      %959 = dma.done [#allocation3], 128
    $region13: #{tpu_custom_call.1} parent=1 // pred_fallthru
      _
    %960 = vsyncpa [#allocation3], 1

</llo_original>
